<compile_context>
chip_gen: v7x
topology: tpu7x:2x2x1
jax: 0.10.0
libtpu: 0.0.40
codegen_flags: <defaults>
</compile_context>

<pallas_src>
import math
import functools

import jax
import jax.numpy as jnp
from jax.experimental import pallas as pl
from jax.experimental.pallas import tpu as pltpu


def _agl_kernel(mlp_b_ref,                         # SMEM: (heads,) f32
                x_ref,                             # VMEM: (tb, nodes, in_dim) compute dtype
                wq_ref, bq_ref,                    # VMEM: (in_dim, D) cdt, (1, D) f32
                wk_all_ref, bk_all_ref,            # VMEM: (in_dim, (H+1)*D) cdt, (1, (H+1)*D) f32
                out_ref,                           # VMEM: (tb, nodes, chunk) f32
                *, heads, out_dim, nodes, chunk, n_neighbors, tb):
    D = heads * out_dim
    x = x_ref[...]                                 # (tb, nodes, in_dim)
    in_dim = x.shape[-1]
    cdt = x.dtype

    # Fused Q projection for all tb*nodes rows (one wide MXU matmul).
    xq = x.reshape(tb * nodes, in_dim)
    q = jnp.dot(xq, wq_ref[...], preferred_element_type=jnp.float32) + bq_ref[...]

    # Fused K projection.  Only the first `chunk` node rows of K feed the
    # attention.  The 1x1-conv channel mix and 1/sqrt(d) scale are folded into
    # the (heads+1) column blocks of wk_all (built in the wrapper):
    #   block 0      -> wk / sqrt(d)                          (residual operand)
    #   block 1 + ho -> wk * mlp_w[ho, head(col)] / sqrt(d)   (conv_ho operand)
    xk = x[:, :chunk, :].reshape(tb * chunk, in_dim)
    k_all = jnp.dot(xk, wk_all_ref[...],
                    preferred_element_type=jnp.float32) + bk_all_ref[...]

    qc = q.astype(cdt)                             # bf16 operands for the MXU,
    kc = k_all.astype(cdt)                         # f32 accumulation below.

    contract_last = (((1,), (1,)), ((), ()))
    col_idx = jax.lax.broadcasted_iota(jnp.int32, (nodes, chunk), 1)

    for b in range(tb):
        qb = qc[b * nodes:(b + 1) * nodes]         # (nodes, D)
        kb = kc[b * chunk:(b + 1) * chunk]         # (chunk, (heads+1)*D)

        # Residual term: sum_h attn_h = q @ (k/sqrt(d))^T  (full-D contraction).
        scores = jax.lax.dot_general(qb, kb[:, :D], contract_last,
                                     preferred_element_type=jnp.float32)
        # relu(1x1 conv over heads) terms: one full-D matmul per output head.
        for ho in range(heads):
            kv = kb[:, (1 + ho) * D:(2 + ho) * D]
            conv = jax.lax.dot_general(qb, kv, contract_last,
                                       preferred_element_type=jnp.float32)
            scores = scores + jnp.maximum(conv + mlp_b_ref[ho], 0.0)

        # Top-k per row via n_neighbors max-and-mask passes (lowest index wins
        # ties, like torch.topk).  scatter_add of top-k values onto zeros keeps
        # each value at its own column -> masked copy of the winners.
        work = scores
        kept = jnp.zeros_like(scores)
        for _ in range(n_neighbors):
            m = jnp.max(work, axis=-1, keepdims=True)
            first = jnp.min(jnp.where(work == m, col_idx, chunk),
                            axis=-1, keepdims=True)
            sel = col_idx == first
            kept = jnp.where(sel, scores, kept)
            work = jnp.where(sel, -jnp.inf, work)

        out_ref[b] = kept


def _pick_batch_tile(B, nodes, target_rows=256):
    """Batch elements per grid step: enough rows to fill the MXU M dimension,
    but keep the parallel grid extent >= 2 so both v7x TensorCores get work."""
    cap = max(1, target_rows // max(nodes, 1))
    if B >= 2:
        cap = min(cap, B // 2)
    tb = 1
    for d in range(1, min(cap, B) + 1):
        if B % d == 0:
            tb = d
    return tb


def adaptive_graph_learning(x, params, *, heads, out_dim, n_neighbors,
                            compute_dtype=jnp.bfloat16):
    B, nodes, in_dim = x.shape
    D = heads * out_dim
    chunk = math.ceil(nodes / 2)
    # required for the reference einsum to be shape-valid (single chunk loop)
    assert out_dim <= chunk
    assert n_neighbors <= chunk

    # Fold 1/sqrt(d) and the (heads, heads) 1x1-conv weight into the key weight:
    # (heads+1, D) per-column scales; variant 0 = residual, variant 1+ho = conv_ho.
    inv_sqrt = 1.0 / math.sqrt(out_dim)
    scale = jnp.concatenate(
        [jnp.full((1, D), inv_sqrt, jnp.float32),
         jnp.repeat(params["mlp_w"].astype(jnp.float32), out_dim, axis=1) * inv_sqrt],
        axis=0)                                                  # (heads+1, D)
    wk_all = (params["wk"].astype(jnp.float32)[:, None, :] * scale[None]
              ).reshape(in_dim, (heads + 1) * D)
    bk_all = (params["bk"].astype(jnp.float32).reshape(1, 1, D) * scale[None]
              ).reshape(1, (heads + 1) * D)

    tb = _pick_batch_tile(B, nodes)
    grid = (B // tb,)

    kernel = functools.partial(
        _agl_kernel, heads=heads, out_dim=out_dim, nodes=nodes,
        chunk=chunk, n_neighbors=n_neighbors, tb=tb)

    out_chunk = pl.pallas_call(
        kernel,
        out_shape=jax.ShapeDtypeStruct((B, nodes, chunk), jnp.float32),
        grid=grid,
        in_specs=[
            pl.BlockSpec(memory_space=pltpu.MemorySpace.SMEM),             # mlp_b
            pl.BlockSpec((tb, nodes, in_dim), lambda g: (g, 0, 0)),        # x
            pl.BlockSpec((in_dim, D), lambda g: (0, 0)),                   # wq
            pl.BlockSpec((1, D), lambda g: (0, 0)),                        # bq
            pl.BlockSpec((in_dim, (heads + 1) * D), lambda g: (0, 0)),     # wk_all
            pl.BlockSpec((1, (heads + 1) * D), lambda g: (0, 0)),          # bk_all
        ],
        out_specs=pl.BlockSpec((tb, nodes, chunk), lambda g: (g, 0, 0)),
        compiler_params=pltpu.CompilerParams(dimension_semantics=("parallel",)),
    )(
        params["mlp_b"].astype(jnp.float32),
        x.astype(compute_dtype),
        params["wq"].astype(compute_dtype),
        params["bq"].astype(jnp.float32),
        wk_all.astype(compute_dtype),
        bk_all,
    )

    # scatter_add of top-k onto zeros(B, nodes, nodes): columns >= chunk are
    # never touched, so pad the live slab back to the full adjacency here.
    return jnp.pad(out_chunk, ((0, 0), (0, 0), (0, nodes - chunk)))


def init_params(key, in_dim, heads, out_dim):
    D = heads * out_dim
    ks = jax.random.split(key, 6)
    s = 1.0 / math.sqrt(in_dim)
    return {
        "wq": jax.random.uniform(ks[0], (in_dim, D), jnp.float32, -s, s),
        "bq": jax.random.uniform(ks[1], (1, D), jnp.float32, -s, s),
        "wk": jax.random.uniform(ks[2], (in_dim, D), jnp.float32, -s, s),
        "bk": jax.random.uniform(ks[3], (1, D), jnp.float32, -s, s),
        "mlp_w": jax.random.uniform(ks[4], (heads, heads), jnp.float32, -0.5, 0.5),
        "mlp_b": jax.random.uniform(ks[5], (heads,), jnp.float32, -0.5, 0.5),
    }


def _reference_row_sums(x, p, heads, out_dim, n_neighbors):
    """Pure-JAX f32 reference for the per-row sum of scattered top-k values
    (tie-robust numerical check)."""
    B, nodes, _ = x.shape
    chunk = math.ceil(nodes / 2)
    q = x @ p["wq"] + p["bq"]                                   # (B, N, D)
    k = x @ p["wk"] + p["bk"]
    query = jnp.transpose(q, (0, 2, 1)).reshape(B, heads, out_dim, nodes)
    query = jnp.transpose(query, (0, 1, 3, 2))                  # (B, H, N, d)
    key = jnp.transpose(k, (0, 2, 1)).reshape(B, heads, out_dim, nodes)
    key = key[..., :chunk]                                      # first chunk only
    attn = jnp.einsum("bhnd,bhdu->bhnu", query, key) / (out_dim ** 0.5)
    conv = (jnp.einsum("oi,binu->bonu", p["mlp_w"], attn)
            + p["mlp_b"][None, :, None, None])
    attn2 = jnp.maximum(conv, 0.0) + attn
    scores = attn2.sum(axis=1)                                  # (B, N, chunk)
    vals, _ = jax.lax.top_k(scores, n_neighbors)
    return vals.sum(axis=-1)                                    # (B, N)


if __name__ == "__main__":
    B, nodes, in_dim = 2, 16, 32
    heads, out_dim, n_neighbors = 4, 8, 4
    chunk = math.ceil(nodes / 2)

    root = jax.random.PRNGKey(0)
    kp, kx = jax.random.split(root)
    params = init_params(kp, in_dim, heads, out_dim)
    x = jax.random.normal(kx, (B, nodes, in_dim), jnp.float32)

    out = adaptive_graph_learning(x, params, heads=heads, out_dim=out_dim,
                                  n_neighbors=n_neighbors)
    out = jax.block_until_ready(out)

    assert out.shape == (B, nodes, nodes)
    assert bool(jnp.all(jnp.isfinite(out)))
    # columns outside the active chunk are never touched by the scatter
    assert bool(jnp.all(out[:, :, chunk:] == 0.0))
    # each row receives exactly n_neighbors scattered values
    assert bool(jnp.all(jnp.sum(out != 0.0, axis=-1) == n_neighbors))
    # tie-robust numeric check against a pure-JAX f32 reference
    ref_sums = _reference_row_sums(x, params, heads, out_dim, n_neighbors)
    assert bool(jnp.allclose(out.sum(axis=-1), ref_sums, rtol=5e-2, atol=1e-1))

    print("KERNEL_OK")
</pallas_src>

<mosaic_0001>
module attributes {stable_mosaic.version = 11 : i64} {
  func.func @_agl_kernel(%arg0: i32, %arg1: memref<4xf32, #tpu.memory_space<smem>>, %arg2: memref<1x16x32xbf16, #tpu.memory_space<vmem>>, %arg3: memref<32x32xbf16, #tpu.memory_space<vmem>>, %arg4: memref<1x32xf32, #tpu.memory_space<vmem>>, %arg5: memref<32x160xbf16, #tpu.memory_space<vmem>>, %arg6: memref<1x160xf32, #tpu.memory_space<vmem>>, %arg7: memref<1x16x8xf32, #tpu.memory_space<vmem>>) attributes {dimension_semantics = [#tpu.dimension_semantics<parallel>], iteration_bounds = array<i64: 2>, scalar_prefetch = 0 : i64, scratch_operands = 0 : i64, tpu.core_type = #tpu.core_type<tc>, window_params = [{transform_indices = @transform_0, window_bounds = array<i64: 4>}, {transform_indices = @transform_1, window_bounds = array<i64: 1, 16, 32>}, {pipeline_mode = #tpu.pipeline_mode<synchronous>, transform_indices = @transform_2, window_bounds = array<i64: 32, 32>}, {pipeline_mode = #tpu.pipeline_mode<synchronous>, transform_indices = @transform_3, window_bounds = array<i64: 1, 32>}, {pipeline_mode = #tpu.pipeline_mode<synchronous>, transform_indices = @transform_4, window_bounds = array<i64: 32, 160>}, {pipeline_mode = #tpu.pipeline_mode<synchronous>, transform_indices = @transform_5, window_bounds = array<i64: 1, 160>}, {transform_indices = @transform_6, window_bounds = array<i64: 1, 16, 8>}]} {
    %c0 = arith.constant 0 : index
    %c0_0 = arith.constant 0 : index
    %c0_1 = arith.constant 0 : index
    %0 = vector.load %arg2[%c0, %c0_0, %c0_1] : memref<1x16x32xbf16, #tpu.memory_space<vmem>>, vector<1x16x32xbf16>
    %1 = vector.shape_cast %0 : vector<1x16x32xbf16> to vector<16x32xbf16>
    %c0_2 = arith.constant 0 : index
    %c0_3 = arith.constant 0 : index
    %2 = vector.load %arg3[%c0_2, %c0_3] : memref<32x32xbf16, #tpu.memory_space<vmem>>, vector<32x32xbf16>
    %cst = arith.constant dense<0.000000e+00> : vector<16x32xf32>
    %3 = tpu.matmul %1, %2, %cst {dimension_numbers = #tpu.dot_dimension_numbers<[1], [0], [0], [1], [0, 0, 1, 1], [], []>} : vector<16x32xbf16>, vector<32x32xbf16>, vector<16x32xf32> -> vector<16x32xf32>
    %c0_4 = arith.constant 0 : index
    %c0_5 = arith.constant 0 : index
    %4 = vector.load %arg4[%c0_4, %c0_5] : memref<1x32xf32, #tpu.memory_space<vmem>>, vector<1x32xf32>
    %5 = vector.broadcast %4 : vector<1x32xf32> to vector<16x32xf32>
    %6 = arith.addf %3, %5 : vector<16x32xf32>
    %7 = vector.extract_strided_slice %0 {offsets = [0, 0, 0], sizes = [1, 8, 32], strides = [1, 1, 1]} : vector<1x16x32xbf16> to vector<1x8x32xbf16>
    %8 = vector.shape_cast %7 : vector<1x8x32xbf16> to vector<8x32xbf16>
    %c0_6 = arith.constant 0 : index
    %c0_7 = arith.constant 0 : index
    %9 = vector.load %arg5[%c0_6, %c0_7] : memref<32x160xbf16, #tpu.memory_space<vmem>>, vector<32x160xbf16>
    %cst_8 = arith.constant dense<0.000000e+00> : vector<8x160xf32>
    %10 = tpu.matmul %8, %9, %cst_8 {dimension_numbers = #tpu.dot_dimension_numbers<[1], [0], [0], [1], [0, 0, 1, 1], [], []>} : vector<8x32xbf16>, vector<32x160xbf16>, vector<8x160xf32> -> vector<8x160xf32>
    %c0_9 = arith.constant 0 : index
    %c0_10 = arith.constant 0 : index
    %11 = vector.load %arg6[%c0_9, %c0_10] : memref<1x160xf32, #tpu.memory_space<vmem>>, vector<1x160xf32>
    %12 = vector.broadcast %11 : vector<1x160xf32> to vector<8x160xf32>
    %13 = arith.addf %10, %12 : vector<8x160xf32>
    %14 = arith.truncf %6 : vector<16x32xf32> to vector<16x32xbf16>
    %15 = arith.truncf %13 : vector<8x160xf32> to vector<8x160xbf16>
    %16 = tpu.iota {dimensions = array<i32: 1>} : vector<16x8xi32>
    %17 = vector.extract_strided_slice %15 {offsets = [0, 0], sizes = [8, 32], strides = [1, 1]} : vector<8x160xbf16> to vector<8x32xbf16>
    %cst_11 = arith.constant dense<0.000000e+00> : vector<16x8xf32>
    %18 = tpu.matmul %14, %17, %cst_11 {dimension_numbers = #tpu.dot_dimension_numbers<[1], [1], [0], [0], [0, 0, 1, 0], [], []>} : vector<16x32xbf16>, vector<8x32xbf16>, vector<16x8xf32> -> vector<16x8xf32>
    %19 = vector.extract_strided_slice %15 {offsets = [0, 32], sizes = [8, 32], strides = [1, 1]} : vector<8x160xbf16> to vector<8x32xbf16>
    %cst_12 = arith.constant dense<0.000000e+00> : vector<16x8xf32>
    %20 = tpu.matmul %14, %19, %cst_12 {dimension_numbers = #tpu.dot_dimension_numbers<[1], [1], [0], [0], [0, 0, 1, 0], [], []>} : vector<16x32xbf16>, vector<8x32xbf16>, vector<16x8xf32> -> vector<16x8xf32>
    %c0_13 = arith.constant 0 : index
    %21 = memref.load %arg1[%c0_13] : memref<4xf32, #tpu.memory_space<smem>>
    %22 = vector.broadcast %21 : f32 to vector<16x8xf32>
    %23 = arith.addf %20, %22 : vector<16x8xf32>
    %cst_14 = arith.constant 0.000000e+00 : f32
    %24 = vector.broadcast %cst_14 : f32 to vector<16x8xf32>
    %25 = arith.maximumf %23, %24 : vector<16x8xf32>
    %26 = arith.addf %18, %25 : vector<16x8xf32>
    %27 = vector.extract_strided_slice %15 {offsets = [0, 64], sizes = [8, 32], strides = [1, 1]} : vector<8x160xbf16> to vector<8x32xbf16>
    %cst_15 = arith.constant dense<0.000000e+00> : vector<16x8xf32>
    %28 = tpu.matmul %14, %27, %cst_15 {dimension_numbers = #tpu.dot_dimension_numbers<[1], [1], [0], [0], [0, 0, 1, 0], [], []>} : vector<16x32xbf16>, vector<8x32xbf16>, vector<16x8xf32> -> vector<16x8xf32>
    %c1 = arith.constant 1 : index
    %29 = memref.load %arg1[%c1] : memref<4xf32, #tpu.memory_space<smem>>
    %30 = vector.broadcast %29 : f32 to vector<16x8xf32>
    %31 = arith.addf %28, %30 : vector<16x8xf32>
    %cst_16 = arith.constant 0.000000e+00 : f32
    %32 = vector.broadcast %cst_16 : f32 to vector<16x8xf32>
    %33 = arith.maximumf %31, %32 : vector<16x8xf32>
    %34 = arith.addf %26, %33 : vector<16x8xf32>
    %35 = vector.extract_strided_slice %15 {offsets = [0, 96], sizes = [8, 32], strides = [1, 1]} : vector<8x160xbf16> to vector<8x32xbf16>
    %cst_17 = arith.constant dense<0.000000e+00> : vector<16x8xf32>
    %36 = tpu.matmul %14, %35, %cst_17 {dimension_numbers = #tpu.dot_dimension_numbers<[1], [1], [0], [0], [0, 0, 1, 0], [], []>} : vector<16x32xbf16>, vector<8x32xbf16>, vector<16x8xf32> -> vector<16x8xf32>
    %c2 = arith.constant 2 : index
    %37 = memref.load %arg1[%c2] : memref<4xf32, #tpu.memory_space<smem>>
    %38 = vector.broadcast %37 : f32 to vector<16x8xf32>
    %39 = arith.addf %36, %38 : vector<16x8xf32>
    %cst_18 = arith.constant 0.000000e+00 : f32
    %40 = vector.broadcast %cst_18 : f32 to vector<16x8xf32>
    %41 = arith.maximumf %39, %40 : vector<16x8xf32>
    %42 = arith.addf %34, %41 : vector<16x8xf32>
    %43 = vector.extract_strided_slice %15 {offsets = [0, 128], sizes = [8, 32], strides = [1, 1]} : vector<8x160xbf16> to vector<8x32xbf16>
    %cst_19 = arith.constant dense<0.000000e+00> : vector<16x8xf32>
    %44 = tpu.matmul %14, %43, %cst_19 {dimension_numbers = #tpu.dot_dimension_numbers<[1], [1], [0], [0], [0, 0, 1, 0], [], []>} : vector<16x32xbf16>, vector<8x32xbf16>, vector<16x8xf32> -> vector<16x8xf32>
    %c3 = arith.constant 3 : index
    %45 = memref.load %arg1[%c3] : memref<4xf32, #tpu.memory_space<smem>>
    %46 = vector.broadcast %45 : f32 to vector<16x8xf32>
    %47 = arith.addf %44, %46 : vector<16x8xf32>
    %cst_20 = arith.constant 0.000000e+00 : f32
    %48 = vector.broadcast %cst_20 : f32 to vector<16x8xf32>
    %49 = arith.maximumf %47, %48 : vector<16x8xf32>
    %50 = arith.addf %42, %49 : vector<16x8xf32>
    %cst_21 = arith.constant 0.000000e+00 : f32
    %51 = vector.broadcast %cst_21 : f32 to vector<16x8xf32>
    %cst_22 = arith.constant dense<0xFF800000> : vector<16xf32>
    %52 = vector.multi_reduction <maximumf>, %50, %cst_22 [1] : vector<16x8xf32> to vector<16xf32>
    %53 = vector.shape_cast %52 : vector<16xf32> to vector<16x1xf32>
    %54 = vector.broadcast %53 : vector<16x1xf32> to vector<16x8xf32>
    %55 = arith.cmpf oeq, %50, %54 : vector<16x8xf32>
    %c8_i32 = arith.constant 8 : i32
    %56 = vector.broadcast %c8_i32 : i32 to vector<16x8xi32>
    %57 = arith.select %55, %16, %56 : vector<16x8xi1>, vector<16x8xi32>
    %cst_23 = arith.constant dense<2147483647> : vector<16xi32>
    %58 = vector.multi_reduction <minsi>, %57, %cst_23 [1] : vector<16x8xi32> to vector<16xi32>
    %59 = vector.shape_cast %58 : vector<16xi32> to vector<16x1xi32>
    %60 = vector.broadcast %59 : vector<16x1xi32> to vector<16x8xi32>
    %61 = arith.cmpi eq, %16, %60 : vector<16x8xi32>
    %62 = arith.select %61, %50, %51 : vector<16x8xi1>, vector<16x8xf32>
    %cst_24 = arith.constant 0xFF800000 : f32
    %63 = vector.broadcast %cst_24 : f32 to vector<16x8xf32>
    %64 = arith.select %61, %63, %50 : vector<16x8xi1>, vector<16x8xf32>
    %cst_25 = arith.constant dense<0xFF800000> : vector<16xf32>
    %65 = vector.multi_reduction <maximumf>, %64, %cst_25 [1] : vector<16x8xf32> to vector<16xf32>
    %66 = vector.shape_cast %65 : vector<16xf32> to vector<16x1xf32>
    %67 = vector.broadcast %66 : vector<16x1xf32> to vector<16x8xf32>
    %68 = arith.cmpf oeq, %64, %67 : vector<16x8xf32>
    %c8_i32_26 = arith.constant 8 : i32
    %69 = vector.broadcast %c8_i32_26 : i32 to vector<16x8xi32>
    %70 = arith.select %68, %16, %69 : vector<16x8xi1>, vector<16x8xi32>
    %cst_27 = arith.constant dense<2147483647> : vector<16xi32>
    %71 = vector.multi_reduction <minsi>, %70, %cst_27 [1] : vector<16x8xi32> to vector<16xi32>
    %72 = vector.shape_cast %71 : vector<16xi32> to vector<16x1xi32>
    %73 = vector.broadcast %72 : vector<16x1xi32> to vector<16x8xi32>
    %74 = arith.cmpi eq, %16, %73 : vector<16x8xi32>
    %75 = arith.select %74, %50, %62 : vector<16x8xi1>, vector<16x8xf32>
    %cst_28 = arith.constant 0xFF800000 : f32
    %76 = vector.broadcast %cst_28 : f32 to vector<16x8xf32>
    %77 = arith.select %74, %76, %64 : vector<16x8xi1>, vector<16x8xf32>
    %cst_29 = arith.constant dense<0xFF800000> : vector<16xf32>
    %78 = vector.multi_reduction <maximumf>, %77, %cst_29 [1] : vector<16x8xf32> to vector<16xf32>
    %79 = vector.shape_cast %78 : vector<16xf32> to vector<16x1xf32>
    %80 = vector.broadcast %79 : vector<16x1xf32> to vector<16x8xf32>
    %81 = arith.cmpf oeq, %77, %80 : vector<16x8xf32>
    %c8_i32_30 = arith.constant 8 : i32
    %82 = vector.broadcast %c8_i32_30 : i32 to vector<16x8xi32>
    %83 = arith.select %81, %16, %82 : vector<16x8xi1>, vector<16x8xi32>
    %cst_31 = arith.constant dense<2147483647> : vector<16xi32>
    %84 = vector.multi_reduction <minsi>, %83, %cst_31 [1] : vector<16x8xi32> to vector<16xi32>
    %85 = vector.shape_cast %84 : vector<16xi32> to vector<16x1xi32>
    %86 = vector.broadcast %85 : vector<16x1xi32> to vector<16x8xi32>
    %87 = arith.cmpi eq, %16, %86 : vector<16x8xi32>
    %88 = arith.select %87, %50, %75 : vector<16x8xi1>, vector<16x8xf32>
    %cst_32 = arith.constant 0xFF800000 : f32
    %89 = vector.broadcast %cst_32 : f32 to vector<16x8xf32>
    %90 = arith.select %87, %89, %77 : vector<16x8xi1>, vector<16x8xf32>
    %cst_33 = arith.constant dense<0xFF800000> : vector<16xf32>
    %91 = vector.multi_reduction <maximumf>, %90, %cst_33 [1] : vector<16x8xf32> to vector<16xf32>
    %92 = vector.shape_cast %91 : vector<16xf32> to vector<16x1xf32>
    %93 = vector.broadcast %92 : vector<16x1xf32> to vector<16x8xf32>
    %94 = arith.cmpf oeq, %90, %93 : vector<16x8xf32>
    %c8_i32_34 = arith.constant 8 : i32
    %95 = vector.broadcast %c8_i32_34 : i32 to vector<16x8xi32>
    %96 = arith.select %94, %16, %95 : vector<16x8xi1>, vector<16x8xi32>
    %cst_35 = arith.constant dense<2147483647> : vector<16xi32>
    %97 = vector.multi_reduction <minsi>, %96, %cst_35 [1] : vector<16x8xi32> to vector<16xi32>
    %98 = vector.shape_cast %97 : vector<16xi32> to vector<16x1xi32>
    %99 = vector.broadcast %98 : vector<16x1xi32> to vector<16x8xi32>
    %100 = arith.cmpi eq, %16, %99 : vector<16x8xi32>
    %101 = arith.select %100, %50, %88 : vector<16x8xi1>, vector<16x8xf32>
    %c0_36 = arith.constant 0 : index
    %c0_37 = arith.constant 0 : index
    %c0_38 = arith.constant 0 : index
    %102 = vector.load %arg7[%c0_36, %c0_37, %c0_38] : memref<1x16x8xf32, #tpu.memory_space<vmem>>, vector<1x16x8xf32>
    %103 = vector.shape_cast %102 : vector<1x16x8xf32> to vector<16x8xf32>
    %104 = vector.shape_cast %101 : vector<16x8xf32> to vector<1x16x8xf32>
    tpu.vector_store %arg7[%c0_36, %c0_37, %c0_38], %104 {strides = array<i32>} : memref<1x16x8xf32, #tpu.memory_space<vmem>>, vector<1x16x8xf32>,
    return
  }
  func.func @transform_0(%arg0: i32) -> i32 {
    %c0_i32 = arith.constant 0 : i32
    %c0_i32_0 = arith.constant 0 : i32
    return %c0_i32 : i32
  }
  func.func @transform_1(%arg0: i32) -> (i32, i32, i32) {
    %c0_i32 = arith.constant 0 : i32
    %c0_i32_0 = arith.constant 0 : i32
    %c0_i32_1 = arith.constant 0 : i32
    return %arg0, %c0_i32, %c0_i32_0 : i32, i32, i32
  }
  func.func @transform_2(%arg0: i32) -> (i32, i32) {
    %c0_i32 = arith.constant 0 : i32
    %c0_i32_0 = arith.constant 0 : i32
    %c0_i32_1 = arith.constant 0 : i32
    return %c0_i32, %c0_i32_0 : i32, i32
  }
  func.func @transform_3(%arg0: i32) -> (i32, i32) {
    %c0_i32 = arith.constant 0 : i32
    %c0_i32_0 = arith.constant 0 : i32
    %c0_i32_1 = arith.constant 0 : i32
    return %c0_i32, %c0_i32_0 : i32, i32
  }
  func.func @transform_4(%arg0: i32) -> (i32, i32) {
    %c0_i32 = arith.constant 0 : i32
    %c0_i32_0 = arith.constant 0 : i32
    %c0_i32_1 = arith.constant 0 : i32
    return %c0_i32, %c0_i32_0 : i32, i32
  }
  func.func @transform_5(%arg0: i32) -> (i32, i32) {
    %c0_i32 = arith.constant 0 : i32
    %c0_i32_0 = arith.constant 0 : i32
    %c0_i32_1 = arith.constant 0 : i32
    return %c0_i32, %c0_i32_0 : i32, i32
  }
  func.func @transform_6(%arg0: i32) -> (i32, i32, i32) {
    %c0_i32 = arith.constant 0 : i32
    %c0_i32_0 = arith.constant 0 : i32
    %c0_i32_1 = arith.constant 0 : i32
    return %arg0, %c0_i32, %c0_i32_0 : i32, i32, i32
  }
}

</mosaic_0001>

<llo_original>
// kernel: tpu_custom_call.1
$region0: #{tpu_custom_call.1}
  #allocation0 [shape = 'u32[]', space=smem, size = 0x4, offset = 0x4, fixed_abs, tag = 'smem constant byte address 0x4 - core index']
  #allocation1 [shape = 'u32[144,128]{1,0:T(1,128)}', space=vmem, size = 0x12000, scoped, tag = 'internal scratch']
  %s0 = inlined_call_operand.hbm [shape: f32[4], index: 0, kind: input, shape index: {}]
  %s1 = inlined_call_operand.hbm [shape: bf16[2,16,32], index: 1, kind: input, shape index: {}]
  %s2 = inlined_call_operand.hbm [shape: bf16[32,32], index: 2, kind: input, shape index: {}]
  %s3 = inlined_call_operand.vmem [shape: f32[1,32], index: 3, kind: input, shape index: {}]
  %s4 = inlined_call_operand.hbm [shape: bf16[32,160], index: 4, kind: input, shape index: {}]
  %s5 = inlined_call_operand.vmem [shape: f32[1,160], index: 5, kind: input, shape index: {}]
  %s6 = inlined_call_operand.vmem [shape: f32[2,16,8], index: 6, kind: output, shape index: {}]
  %s7 = sld [smem:[#allocation0]]
  $region73: #{tpu_custom_call.1} parent=0
    _
  %s9 = ssub.s32 1, %s7
  %s10 = scalar_select 0, %s9, %s7
  $region1: #{tpu_custom_call.1} parent=0
    #allocation2 [shape = 'u8[512]{0}', space=smem, size = 0x200, scoped, tag = 'input window, operand 0, single buffered']
    #allocation3 [shape = 's32[2]{0}', space=sflag, size = 0x8, scoped, tag = 'scoped memory for tpu_custom_call.1']
    #allocation4 [shape = 's32[2]{0}', space=sflag, size = 0x8, scoped, tag = 'scoped memory for tpu_custom_call.1']
    #allocation5 [shape = 'u8[8192]{0}', space=vmem, size = 0x2000, scoped, tag = 'input window, operand 1']
    #allocation6 [shape = 'u8[8192]{0}', space=vmem, size = 0x2000, scoped, tag = 'input window, operand 2, single buffered']
    #allocation7 [shape = 's32[1]{0}', space=sflag, size = 0x4, scoped, tag = 'scoped memory for tpu_custom_call.1']
    #allocation8 [shape = 'u8[16384]{0}', space=vmem, size = 0x4000, scoped, tag = 'input window, operand 4, single buffered']
    %11 = vsyncpa [#allocation4], 0
    %12 = vsyncpa [#allocation3], 0
    %s13 = scalar_lea.sflag [#allocation3], 1
    %14 = vsyncpa %s13, 0
    %15 = vsyncpa [#allocation7], 0
    loop: start=0, step=1, limit=4
    $region2: #{tpu_custom_call.1} parent=1 // loop_pre_header
      _
    $region3: #{tpu_custom_call.1} parent=1 // loop_header
      %s17 = sphi 0, %s21
      %p18 = scmp.ge.s32.totalorder %s17, 4
      %s25 = sphi 0, %s25
      %s27 = sphi 0, %s25
      %s28 = sphi 0, %s27
      %s42 = sphi 0, %s28
      %s48 = sphi 0, %s50
      %s51 = sphi 0, %s48
      %s52 = sphi 0, %s51
      %s68 = sphi 0, %s52
      %s72 = sphi 0, %s72
      %s74 = sphi 0, %s72
      %s75 = sphi 0, %s74
      %s89 = sphi 0, %s75
      %s93 = sphi 0, %s93
      %s95 = sphi 0, %s93
      %s96 = sphi 0, %s95
      %s110 = sphi 0, %s96
      %s114 = sphi 0, %s114
      %s116 = sphi 0, %s114
      %s117 = sphi 0, %s116
      %s131 = sphi 0, %s117
      %s135 = sphi 0, %s135
      %s137 = sphi 0, %s135
      %s138 = sphi 0, %s137
      %s152 = sphi 0, %s138
      %s158 = sphi 0, %s160
      %s161 = sphi 0, %s158
      %s162 = sphi 0, %s161
      %s178 = sphi 0, %s162
    $region4: #{tpu_custom_call.1} parent=1 // loop_header_branch
      %20 = sbr.rel (%p18) target = $region8
    $region5: #{tpu_custom_call.1} parent=1 // loop_body
      %s22 = ssub.s32 %s17, 1
      %s23 = ssub.s32 %s17, 2
      %s24 = sadd.s32 %s17, 1
      %s26 = sadd.s32 %s25, 1
      %p29 = scmp.eq.s32.totalorder %s17, 1
      %p30 = scmp.ne.s32.totalorder %s25, %s27
      %p31 = scmp.eq.s32.totalorder %s17, 0
      %p32 = por %p30, %p31
      %p33 = scmp.ne.s32.totalorder %s25, %s27
      %p34 = scmp.eq.s32.totalorder %s22, 1
      %p35 = por %p33, %p34
      %p36 = scmp.ne.s32.totalorder %s27, %s28
      %p37 = scmp.eq.s32.totalorder %s22, 0
      %p38 = por %p36, %p37
      %p39 = scmp.ne.s32.totalorder %s27, %s28
      %p40 = scmp.eq.s32.totalorder %s23, 1
      %p41 = por %p39, %p40
      %p43 = scmp.ne.s32.totalorder %s28, %s42
      %p44 = scmp.eq.s32.totalorder %s23, 0
      %p45 = por %p43, %p44
      %s46 = ssub.s32 %s17, %s24
      %p47 = scmp.eq.s32.totalorder %s46, 0
      %s49 = sadd.s32 %s48, 1
      %s50 = scalar_select %p47, %s48, %s49
      %p53 = pneg %p47
      %p54 = scmp.eq.s32.totalorder %s17, 1
      %p55 = por %p53, %p54
      %p56 = scmp.ne.s32.totalorder %s48, %s51
      %p57 = scmp.eq.s32.totalorder %s17, 0
      %p58 = por %p56, %p57
      %p59 = scmp.ne.s32.totalorder %s48, %s51
      %p60 = scmp.eq.s32.totalorder %s22, 1
      %p61 = por %p59, %p60
      %p62 = scmp.ne.s32.totalorder %s51, %s52
      %p63 = scmp.eq.s32.totalorder %s22, 0
      %p64 = por %p62, %p63
      %p65 = scmp.ne.s32.totalorder %s51, %s52
      %p66 = scmp.eq.s32.totalorder %s23, 1
      %p67 = por %p65, %p66
      %p69 = scmp.ne.s32.totalorder %s52, %s68
      %p70 = scmp.eq.s32.totalorder %s23, 0
      %p71 = por %p69, %p70
      %s73 = sadd.s32 %s72, 1
      %p76 = scmp.eq.s32.totalorder %s17, 1
      %p77 = scmp.ne.s32.totalorder %s72, %s74
      %p78 = scmp.eq.s32.totalorder %s17, 0
      %p79 = por %p77, %p78
      %p80 = scmp.ne.s32.totalorder %s72, %s74
      %p81 = scmp.eq.s32.totalorder %s22, 1
      %p82 = por %p80, %p81
      %p83 = scmp.ne.s32.totalorder %s74, %s75
      %p84 = scmp.eq.s32.totalorder %s22, 0
      %p85 = por %p83, %p84
      %p86 = scmp.ne.s32.totalorder %s74, %s75
      %p87 = scmp.eq.s32.totalorder %s23, 1
      %p88 = por %p86, %p87
      %p90 = scmp.ne.s32.totalorder %s75, %s89
      %p91 = scmp.eq.s32.totalorder %s23, 0
      %p92 = por %p90, %p91
      %s94 = sadd.s32 %s93, 1
      %p97 = scmp.eq.s32.totalorder %s17, 1
      %p98 = scmp.ne.s32.totalorder %s93, %s95
      %p99 = scmp.eq.s32.totalorder %s17, 0
      %p100 = por %p98, %p99
      %p101 = scmp.ne.s32.totalorder %s93, %s95
      %p102 = scmp.eq.s32.totalorder %s22, 1
      %p103 = por %p101, %p102
      %p104 = scmp.ne.s32.totalorder %s95, %s96
      %p105 = scmp.eq.s32.totalorder %s22, 0
      %p106 = por %p104, %p105
      %p107 = scmp.ne.s32.totalorder %s95, %s96
      %p108 = scmp.eq.s32.totalorder %s23, 1
      %p109 = por %p107, %p108
      %p111 = scmp.ne.s32.totalorder %s96, %s110
      %p112 = scmp.eq.s32.totalorder %s23, 0
      %p113 = por %p111, %p112
      %s115 = sadd.s32 %s114, 1
      %p118 = scmp.eq.s32.totalorder %s17, 1
      %p119 = scmp.ne.s32.totalorder %s114, %s116
      %p120 = scmp.eq.s32.totalorder %s17, 0
      %p121 = por %p119, %p120
      %p122 = scmp.ne.s32.totalorder %s114, %s116
      %p123 = scmp.eq.s32.totalorder %s22, 1
      %p124 = por %p122, %p123
      %p125 = scmp.ne.s32.totalorder %s116, %s117
      %p126 = scmp.eq.s32.totalorder %s22, 0
      %p127 = por %p125, %p126
      %p128 = scmp.ne.s32.totalorder %s116, %s117
      %p129 = scmp.eq.s32.totalorder %s23, 1
      %p130 = por %p128, %p129
      %p132 = scmp.ne.s32.totalorder %s117, %s131
      %p133 = scmp.eq.s32.totalorder %s23, 0
      %p134 = por %p132, %p133
      %s136 = sadd.s32 %s135, 1
      %p139 = scmp.eq.s32.totalorder %s17, 1
      %p140 = scmp.ne.s32.totalorder %s135, %s137
      %p141 = scmp.eq.s32.totalorder %s17, 0
      %p142 = por %p140, %p141
      %p143 = scmp.ne.s32.totalorder %s135, %s137
      %p144 = scmp.eq.s32.totalorder %s22, 1
      %p145 = por %p143, %p144
      %p146 = scmp.ne.s32.totalorder %s137, %s138
      %p147 = scmp.eq.s32.totalorder %s22, 0
      %p148 = por %p146, %p147
      %p149 = scmp.ne.s32.totalorder %s137, %s138
      %p150 = scmp.eq.s32.totalorder %s23, 1
      %p151 = por %p149, %p150
      %p153 = scmp.ne.s32.totalorder %s138, %s152
      %p154 = scmp.eq.s32.totalorder %s23, 0
      %p155 = por %p153, %p154
      %s156 = ssub.s32 %s17, %s24
      %p157 = scmp.eq.s32.totalorder %s156, 0
      %s159 = sadd.s32 %s158, 1
      %s160 = scalar_select %p157, %s158, %s159
      %p163 = pneg %p157
      %p164 = scmp.eq.s32.totalorder %s17, 1
      %p165 = por %p163, %p164
      %p166 = scmp.ne.s32.totalorder %s158, %s161
      %p167 = scmp.eq.s32.totalorder %s17, 0
      %p168 = por %p166, %p167
      %p169 = scmp.ne.s32.totalorder %s158, %s161
      %p170 = scmp.eq.s32.totalorder %s22, 1
      %p171 = por %p169, %p170
      %p172 = scmp.ne.s32.totalorder %s161, %s162
      %p173 = scmp.eq.s32.totalorder %s22, 0
      %p174 = por %p172, %p173
      %p175 = scmp.ne.s32.totalorder %s161, %s162
      %p176 = scmp.eq.s32.totalorder %s23, 1
      %p177 = por %p175, %p176
      %p179 = scmp.ne.s32.totalorder %s162, %s178
      %p180 = scmp.eq.s32.totalorder %s23, 0
      %p181 = por %p179, %p180
      %p182 = scmp.le.s32.totalorder 1, %s17
      %p183 = scmp.lt.s32.totalorder %s17, 3
      %p184 = pnand %p182, %p183
      %p185 = pneg %p184
      // Predicated region
      $region9: #{tpu_custom_call.1} parent=5 // pred_check
        _
      $region10: #{tpu_custom_call.1} parent=5 // pred_check_branch
        %187 = sbr.rel (%p184) target = $region12
      $region11: #{tpu_custom_call.1} parent=5 // pred_region
        %s188 = ssub.s32 %s17, 1
        // Predicated region
        $region13: #{tpu_custom_call.1} parent=11 // pred_check
          %p189 = pneg %p38
        $region14: #{tpu_custom_call.1} parent=11 // pred_check_branch
          %191 = sbr.rel (%p189) target = $region16
        $region15: #{tpu_custom_call.1} parent=11 // pred_region
          %s193 = ssub.s32 16, 16
          %194 = vsyncadd [#allocation4], %s193
          %197 = dma.hbm_to_smem %s0, 16, [#allocation2], [#allocation4]
        $region16: #{tpu_custom_call.1} parent=11 // pred_fallthru
          _
        // Predicated region
        $region17: #{tpu_custom_call.1} parent=11 // pred_check
          %p198 = pneg %p85
        $region18: #{tpu_custom_call.1} parent=11 // pred_check_branch
          %200 = sbr.rel (%p198) target = $region20
        $region19: #{tpu_custom_call.1} parent=11 // pred_region
          %s202 = ssub.s32 256, 256
          %203 = vsyncadd [#allocation7], %s202
          %s204 = sshll.u32 [#allocation6], 4
          %s205 = int_to_ptr.vmem [resolvable:$true] %s204
          %210 = dma.hbm_to_vmem [thread:$0]  %s2, 256, %s205, [#allocation7], 64, 64, 4
        $region20: #{tpu_custom_call.1} parent=11 // pred_fallthru
          _
        // Predicated region
        $region21: #{tpu_custom_call.1} parent=11 // pred_check
          %p211 = pneg %p106
        $region22: #{tpu_custom_call.1} parent=11 // pred_check_branch
          %213 = sbr.rel (%p211) target = $region24
        $region23: #{tpu_custom_call.1} parent=11 // pred_region
          _
        $region24: #{tpu_custom_call.1} parent=11 // pred_fallthru
          _
        // Predicated region
        $region25: #{tpu_custom_call.1} parent=11 // pred_check
          %p214 = pneg %p127
        $region26: #{tpu_custom_call.1} parent=11 // pred_check_branch
          %216 = sbr.rel (%p214) target = $region28
        $region27: #{tpu_custom_call.1} parent=11 // pred_region
          %s218 = ssub.s32 512, 512
          %219 = vsyncadd [#allocation7], %s218
          %s220 = sshll.u32 [#allocation8], 4
          %s221 = int_to_ptr.vmem [resolvable:$true] %s220
          %226 = dma.hbm_to_vmem [thread:$0]  %s4, 512, %s221, [#allocation7], 128, 128, 8
        $region28: #{tpu_custom_call.1} parent=11 // pred_fallthru
          _
        // Predicated region
        $region29: #{tpu_custom_call.1} parent=11 // pred_check
          %p227 = pneg %p148
        $region30: #{tpu_custom_call.1} parent=11 // pred_check_branch
          %229 = sbr.rel (%p227) target = $region32
        $region31: #{tpu_custom_call.1} parent=11 // pred_region
          _
        $region32: #{tpu_custom_call.1} parent=11 // pred_fallthru
          _
      $region12: #{tpu_custom_call.1} parent=5 // pred_fallthru
        _
      %p230 = scmp.lt.s32.totalorder %s17, 2
      // Predicated region
      $region33: #{tpu_custom_call.1} parent=5 // pred_check
        %p231 = pneg %p230
      $region34: #{tpu_custom_call.1} parent=5 // pred_check_branch
        %233 = sbr.rel (%p231) target = $region36
      $region35: #{tpu_custom_call.1} parent=5 // pred_region
        // Predicated region
        $region37: #{tpu_custom_call.1} parent=35 // pred_check
          %p234 = pneg %p58
        $region38: #{tpu_custom_call.1} parent=35 // pred_check_branch
          %236 = sbr.rel (%p234) target = $region40
        $region39: #{tpu_custom_call.1} parent=35 // pred_region
          %s237 = sand.u32 %s48, 1
          %s238 = scalar_lea.sflag [#allocation3], %s237
          %s239 = sand.u32 %s48, 1
          %s240 = smul.addr %s239, 8
          %s241 = scalar_lea.vmem [#allocation5], %s240
          %s243 = ssub.s32 128, 128
          %244 = vsyncadd %s238, %s243
          %s245 = smul.addr %s17, 2
          %s246 = smul.addr %s245, 64
          %s247 = scalar_lea.hbm %s1, %s246
          %s248 = sshll.u32 %s241, 4
          %s249 = int_to_ptr.vmem [resolvable:$true] %s248
          %254 = dma.hbm_to_vmem [thread:$0]  %s247, 128, %s249, %s238, 64, 64, 4
        $region40: #{tpu_custom_call.1} parent=35 // pred_fallthru
          _
      $region36: #{tpu_custom_call.1} parent=5 // pred_fallthru
        _
      %p255 = scmp.le.s32.totalorder 1, %s17
      %p256 = scmp.lt.s32.totalorder %s17, 3
      %p257 = pnand %p255, %p256
      %p258 = pneg %p257
      // Predicated region
      $region41: #{tpu_custom_call.1} parent=5 // pred_check
        _
      $region42: #{tpu_custom_call.1} parent=5 // pred_check_branch
        %260 = sbr.rel (%p257) target = $region44
      $region43: #{tpu_custom_call.1} parent=5 // pred_region
        %s261 = ssub.s32 %s17, 1
        // Predicated region
        $region45: #{tpu_custom_call.1} parent=43 // pred_check
          %p262 = pneg %p38
        $region46: #{tpu_custom_call.1} parent=43 // pred_check_branch
          %264 = sbr.rel (%p262) target = $region48
        $region47: #{tpu_custom_call.1} parent=43 // pred_region
          %265 = dma.done [#allocation4], 16
        $region48: #{tpu_custom_call.1} parent=43 // pred_fallthru
          _
        %s266 = sand.u32 %s51, 1
        %s267 = scalar_lea.sflag [#allocation3], %s266
        %s268 = sand.u32 %s51, 1
        %s269 = smul.addr %s268, 8
        %s270 = scalar_lea.vmem [#allocation5], %s269
        // Predicated region
        $region49: #{tpu_custom_call.1} parent=43 // pred_check
          %p271 = pneg %p64
        $region50: #{tpu_custom_call.1} parent=43 // pred_check_branch
          %273 = sbr.rel (%p271) target = $region52
        $region51: #{tpu_custom_call.1} parent=43 // pred_region
          %274 = dma.done %s267, 128
        $region52: #{tpu_custom_call.1} parent=43 // pred_fallthru
          _
        // Predicated region
        $region53: #{tpu_custom_call.1} parent=43 // pred_check
          %p275 = pneg %p85
        $region54: #{tpu_custom_call.1} parent=43 // pred_check_branch
          %277 = sbr.rel (%p275) target = $region56
        $region55: #{tpu_custom_call.1} parent=43 // pred_region
          %278 = dma.done [#allocation7], 256
        $region56: #{tpu_custom_call.1} parent=43 // pred_fallthru
          _
        // Predicated region
        $region57: #{tpu_custom_call.1} parent=43 // pred_check
          %p279 = pneg %p127
        $region58: #{tpu_custom_call.1} parent=43 // pred_check_branch
          %281 = sbr.rel (%p279) target = $region60
        $region59: #{tpu_custom_call.1} parent=43 // pred_region
          %282 = dma.done [#allocation7], 512
        $region60: #{tpu_custom_call.1} parent=43 // pred_fallthru
          _
        %283 = sfence
        %p284 = pneg %p38
        %p285 = pneg %p35
        %s286 = sand.u32 %s51, 1
        %s287 = scalar_lea.sflag [#allocation3], %s286
        %s288 = sand.u32 %s51, 1
        %s289 = smul.addr %s288, 8
        %s290 = scalar_lea.vmem [#allocation5], %s289
        %p291 = pneg %p64
        %p292 = pneg %p61
        %p293 = pneg %p85
        %p294 = pneg %p82
        %p295 = pneg %p106
        %p296 = pneg %p103
        %p297 = pneg %p127
        %p298 = pneg %p124
        %p299 = pneg %p148
        %p300 = pneg %p145
        %p301 = pneg %p174
        %p302 = pneg %p171
        %p303 = scmp.lt.s32.totalorder %s22, 1
        %s304 = scalar_select %p303, %s22, 1
        %s305 = smul.addr %s304, 2
        %s306 = smul.addr %s305, 8
        %s307 = scalar_lea.vmem %s6, %s306
        %p308 = scmp.lt.s32.totalorder %s22, 1
        %s309 = scalar_select %p308, %s22, 1
        %s310 = smul.addr %s309, 2
        %s311 = smul.addr %s310, 8
        %s312 = scalar_lea.vmem %s6, %s311
        %v314 = vld [vmem:[%s270] sm:$0xf]
        %v315 = vld [vmem:[%s270 + $0x4] sm:$0xf]
        %v316 = vld [vmem:[#allocation6] sm:$0xf]
        %v317 = vld [vmem:[#allocation6 + $0x4] sm:$0xf]
        %v318 = vld [vmem:[#allocation6 + $0x8] sm:$0xf]
        %v319 = vld [vmem:[#allocation6 + $0xc] sm:$0xf]
        %v320 = vld [vmem:[%s3] sm:$0x1]
        %v322 = vlaneseq
        %v323 = vshrl.u32 %v322, 7
        %v324 = vsub.s32 0, %v323
        %v325 = vrot.slane %v320, %v324
        %v329 = vunpack.c.l.b16 %v314
        %v330 = vunpack.c.l.b16 %v315
        %v331 = vpack.c.b16 %v330, %v329
        %v336 = vunpack.c.l.b16 %v316
        %v337 = vunpack.c.l.b16 %v317
        %v338 = vunpack.c.l.b16 %v318
        %v339 = vunpack.c.l.b16 %v319
        %v340 = vpack.c.b16 %v337, %v336
        %v341 = vpack.c.b16 %v339, %v338
        %vm344 = vcmask 261120
        %v346 = vsel %vm344, %v331, 0
        %348 = vmatprep.subr.bf16.mxu0 0
        %349 = vmatpush1.bf16.msra.mxu0 %v340
        %350 = vmatprep.subr.bf16.mxu0 0
        %351 = vmatpush1.bf16.msra.mxu0 %v341
        %352 = vmatprep.subr.bf16.mxu0 0
        %353 = vmatpush1.bf16.msra.mxu0 0
        %354 = vmatprep.subr.bf16.mxu0 0
        %355 = vmatpush1.bf16.msra.mxu0 0
        %356 = vmatprep.subr.bf16.mxu0 0
        %357 = vmatpush1.bf16.msra.mxu0 0
        %358 = vmatprep.subr.bf16.mxu0 0
        %359 = vmatpush1.bf16.msra.mxu0 0
        %360 = vmatprep.subr.bf16.mxu0 0
        %361 = vmatpush1.bf16.msra.mxu0 0
        %362 = vmatprep.subr.bf16.mxu0 0
        %363 = vmatpush1.bf16.msra.mxu0 0
        %364 = vmatprep.subr.bf16.mxu0 0
        %365 = vmatpush1.bf16.msra.mxu0 0
        %366 = vmatprep.subr.bf16.mxu0 0
        %367 = vmatpush1.bf16.msra.mxu0 0
        %368 = vmatprep.subr.bf16.mxu0 0
        %369 = vmatpush1.bf16.msra.mxu0 0
        %370 = vmatprep.subr.bf16.mxu0 0
        %371 = vmatpush1.bf16.msra.mxu0 0
        %372 = vmatprep.subr.bf16.mxu0 0
        %373 = vmatpush1.bf16.msra.mxu0 0
        %374 = vmatprep.subr.bf16.mxu0 0
        %375 = vmatpush1.bf16.msra.mxu0 0
        %376 = vmatprep.subr.bf16.mxu0 0
        %377 = vmatpush1.bf16.msra.mxu0 0
        %378 = vmatprep.subr.bf16.mxu0 0
        %379 = vmatpush1.bf16.msra.mxu0 0
        %380 = vmatprep.mubr.bf16.mxu0 0
        %381 = vmatmul.mubr.bf16.gmra.mrb[0].mxu0 %v346
        %v382 = vpop.f32.mrb[0].mxu0
        %v383 = vadd.f32 %v325, %v382
        %v384 = vpop.f32.mrb[0].mxu0
        %v385 = vpop.f32.mrb[0].mxu0
        %v386 = vadd.f32 %v325, %v385
        %v387 = vpop.f32.mrb[0].mxu0
        %388 = vdwg.mxu0
        %v389 = vld [vmem:[#allocation8] sm:$0xff]
        %v390 = vld [vmem:[#allocation8 + $0x8] sm:$0xff]
        %v391 = vld [vmem:[#allocation8 + $0x10] sm:$0xff]
        %v392 = vld [vmem:[#allocation8 + $0x18] sm:$0xff]
        %v393 = vld [vmem:[%s5] sm:$0x3]
        %v395 = vlaneseq
        %v396 = vshrl.u32 %v395, 7
        %v397 = vsub.s32 0, %v396
        %v398 = vrot.slane %v393, %v397
        %v399 = vlaneseq
        %v400 = vshrl.u32 %v399, 7
        %v401 = vsub.s32 1, %v400
        %v402 = vrot.slane %v393, %v401
        %v409 = vunpack.c.l.b16 %v389
        %v410 = vunpack.c.h.b16 %v389
        %v411 = vunpack.c.l.b16 %v390
        %v412 = vunpack.c.h.b16 %v390
        %v413 = vunpack.c.l.b16 %v391
        %v414 = vunpack.c.h.b16 %v391
        %v415 = vunpack.c.l.b16 %v392
        %v416 = vunpack.c.h.b16 %v392
        %v417 = vpack.c.b16 %v411, %v409
        %v418 = vpack.c.b16 %v412, %v410
        %v419 = vpack.c.b16 %v415, %v413
        %v420 = vpack.c.b16 %v416, %v414
        %v426 = vsel %vm344, %v314, 0
        %428 = vmatprep.subr.bf16.mxu0 %v418
        %429 = vmatpush1.bf16.msra.mxu0 %v417
        %430 = vmatprep.subr.bf16.mxu0 %v420
        %431 = vmatpush1.bf16.msra.mxu0 %v419
        %432 = vmatprep.subr.bf16.mxu0 0
        %433 = vmatpush1.bf16.msra.mxu0 0
        %434 = vmatprep.subr.bf16.mxu0 0
        %435 = vmatpush1.bf16.msra.mxu0 0
        %436 = vmatprep.subr.bf16.mxu0 0
        %437 = vmatpush1.bf16.msra.mxu0 0
        %438 = vmatprep.subr.bf16.mxu0 0
        %439 = vmatpush1.bf16.msra.mxu0 0
        %440 = vmatprep.subr.bf16.mxu0 0
        %441 = vmatpush1.bf16.msra.mxu0 0
        %442 = vmatprep.subr.bf16.mxu0 0
        %443 = vmatpush1.bf16.msra.mxu0 0
        %444 = vmatprep.subr.bf16.mxu0 0
        %445 = vmatpush1.bf16.msra.mxu0 0
        %446 = vmatprep.subr.bf16.mxu0 0
        %447 = vmatpush1.bf16.msra.mxu0 0
        %448 = vmatprep.subr.bf16.mxu0 0
        %449 = vmatpush1.bf16.msra.mxu0 0
        %450 = vmatprep.subr.bf16.mxu0 0
        %451 = vmatpush1.bf16.msra.mxu0 0
        %452 = vmatprep.subr.bf16.mxu0 0
        %453 = vmatpush1.bf16.msra.mxu0 0
        %454 = vmatprep.subr.bf16.mxu0 0
        %455 = vmatpush1.bf16.msra.mxu0 0
        %456 = vmatprep.subr.bf16.mxu0 0
        %457 = vmatpush1.bf16.msra.mxu0 0
        %458 = vmatprep.subr.bf16.mxu0 0
        %459 = vmatpush1.bf16.msra.mxu0 0
        %460 = vmatprep.mubr.bf16.mxu0 0
        %461 = vmatmul.mubr.bf16.gmra.mrb[0].mxu0 %v426
        %v462 = vpop.f32.mrb[0].mxu0
        %v463 = vadd.f32 %v398, %v462
        %v464 = vpop.f32.mrb[0].mxu0
        %v465 = vadd.f32 %v402, %v464
        %v466 = vpop.f32.mrb[0].mxu0
        %v467 = vpop.f32.mrb[0].mxu0
        %468 = vdwg.mxu0
        %v469 = vpack.c.bf16 %v386, %v383
        %v470 = vpack.c.bf16 %v463, %v463
        %v471 = vpack.c.bf16 %v465, %v465
        %v472 = vlaneseq
        %v473 = vand.u32 %v472, 127
        %s474 = sld [smem:[#allocation2]]
        %v475 = vstv %s474
        %477 = vrot.lane.b32.xlu0 %v470, 96
        %v478 = vpop.permute.xlu0 %477
        %v480 = vsel %vm344, %v469, 0
        %v483 = vsel %vm344, %v478, 0
        %485 = vmatprep.subr.bf16.mxu0 0
        %486 = vmatpush1.bf16.xpose.msra.mxu0 %v483
        %487 = vmatprep.subr.bf16.mxu0 0
        %488 = vmatpush1.bf16.xpose.msra.mxu0 0
        %489 = vmatprep.subr.bf16.mxu0 0
        %490 = vmatpush1.bf16.xpose.msra.mxu0 0
        %491 = vmatprep.subr.bf16.mxu0 0
        %492 = vmatpush1.bf16.xpose.msra.mxu0 0
        %493 = vmatprep.subr.bf16.mxu0 0
        %494 = vmatpush1.bf16.xpose.msra.mxu0 0
        %495 = vmatprep.subr.bf16.mxu0 0
        %496 = vmatpush1.bf16.xpose.msra.mxu0 0
        %497 = vmatprep.subr.bf16.mxu0 0
        %498 = vmatpush1.bf16.xpose.msra.mxu0 0
        %499 = vmatprep.subr.bf16.mxu0 0
        %500 = vmatpush1.bf16.xpose.msra.mxu0 0
        %501 = vmatprep.subr.bf16.mxu0 0
        %502 = vmatpush1.bf16.xpose.msra.mxu0 0
        %503 = vmatprep.subr.bf16.mxu0 0
        %504 = vmatpush1.bf16.xpose.msra.mxu0 0
        %505 = vmatprep.subr.bf16.mxu0 0
        %506 = vmatpush1.bf16.xpose.msra.mxu0 0
        %507 = vmatprep.subr.bf16.mxu0 0
        %508 = vmatpush1.bf16.xpose.msra.mxu0 0
        %509 = vmatprep.subr.bf16.mxu0 0
        %510 = vmatpush1.bf16.xpose.msra.mxu0 0
        %511 = vmatprep.subr.bf16.mxu0 0
        %512 = vmatpush1.bf16.xpose.msra.mxu0 0
        %513 = vmatprep.subr.bf16.mxu0 0
        %514 = vmatpush1.bf16.xpose.msra.mxu0 0
        %515 = vmatprep.subr.bf16.mxu0 0
        %516 = vmatpush1.bf16.xpose.msra.mxu0 0
        %517 = vmatprep.mubr.bf16.mxu0 0
        %518 = vmatmul.mubr.bf16.gmra.mrb[0].mxu0 %v480
        %v519 = vpop.f32.mrb[0].mxu0
        %v520 = vadd.f32 %v475, %v519
        %v521 = vpop.f32.mrb[0].mxu0
        %v522 = vpop.f32.mrb[0].mxu0
        %v523 = vadd.f32 %v475, %v522
        %v524 = vpop.f32.mrb[0].mxu0
        %525 = vdwg.mxu0
        %v526 = vmax.f32 %v520, 0.0
        %v527 = vmax.f32 %v523, 0.0
        %v529 = vsel %vm344, %v470, 0
        %531 = vmatprep.subr.bf16.mxu0 0
        %532 = vmatpush1.bf16.xpose.msra.mxu0 %v529
        %533 = vmatprep.subr.bf16.mxu0 0
        %534 = vmatpush1.bf16.xpose.msra.mxu0 0
        %535 = vmatprep.subr.bf16.mxu0 0
        %536 = vmatpush1.bf16.xpose.msra.mxu0 0
        %537 = vmatprep.subr.bf16.mxu0 0
        %538 = vmatpush1.bf16.xpose.msra.mxu0 0
        %539 = vmatprep.subr.bf16.mxu0 0
        %540 = vmatpush1.bf16.xpose.msra.mxu0 0
        %541 = vmatprep.subr.bf16.mxu0 0
        %542 = vmatpush1.bf16.xpose.msra.mxu0 0
        %543 = vmatprep.subr.bf16.mxu0 0
        %544 = vmatpush1.bf16.xpose.msra.mxu0 0
        %545 = vmatprep.subr.bf16.mxu0 0
        %546 = vmatpush1.bf16.xpose.msra.mxu0 0
        %547 = vmatprep.subr.bf16.mxu0 0
        %548 = vmatpush1.bf16.xpose.msra.mxu0 0
        %549 = vmatprep.subr.bf16.mxu0 0
        %550 = vmatpush1.bf16.xpose.msra.mxu0 0
        %551 = vmatprep.subr.bf16.mxu0 0
        %552 = vmatpush1.bf16.xpose.msra.mxu0 0
        %553 = vmatprep.subr.bf16.mxu0 0
        %554 = vmatpush1.bf16.xpose.msra.mxu0 0
        %555 = vmatprep.subr.bf16.mxu0 0
        %556 = vmatpush1.bf16.xpose.msra.mxu0 0
        %557 = vmatprep.subr.bf16.mxu0 0
        %558 = vmatpush1.bf16.xpose.msra.mxu0 0
        %559 = vmatprep.subr.bf16.mxu0 0
        %560 = vmatpush1.bf16.xpose.msra.mxu0 0
        %561 = vmatprep.subr.bf16.mxu0 0
        %562 = vmatpush1.bf16.xpose.msra.mxu0 0
        %563 = vmatprep.mubr.bf16.mxu0 0
        %564 = vmatmul.mubr.bf16.gmra.mrb[0].mxu0 %v480
        %v565 = vpop.f32.mrb[0].mxu0
        %v566 = vadd.f32 %v526, %v565
        %v567 = vpop.f32.mrb[0].mxu0
        %v568 = vpop.f32.mrb[0].mxu0
        %v569 = vadd.f32 %v527, %v568
        %v570 = vpop.f32.mrb[0].mxu0
        %571 = vdwg.mxu0
        %s572 = sld [smem:[#allocation2 + $0x1]]
        %v573 = vstv %s572
        %574 = vrot.lane.b32.xlu0 %v470, 64
        %v575 = vpop.permute.xlu0 %574
        %v577 = vsel %vm344, %v575, 0
        %579 = vmatprep.subr.bf16.mxu0 0
        %580 = vmatpush1.bf16.xpose.msra.mxu0 %v577
        %581 = vmatprep.subr.bf16.mxu0 0
        %582 = vmatpush1.bf16.xpose.msra.mxu0 0
        %583 = vmatprep.subr.bf16.mxu0 0
        %584 = vmatpush1.bf16.xpose.msra.mxu0 0
        %585 = vmatprep.subr.bf16.mxu0 0
        %586 = vmatpush1.bf16.xpose.msra.mxu0 0
        %587 = vmatprep.subr.bf16.mxu0 0
        %588 = vmatpush1.bf16.xpose.msra.mxu0 0
        %589 = vmatprep.subr.bf16.mxu0 0
        %590 = vmatpush1.bf16.xpose.msra.mxu0 0
        %591 = vmatprep.subr.bf16.mxu0 0
        %592 = vmatpush1.bf16.xpose.msra.mxu0 0
        %593 = vmatprep.subr.bf16.mxu0 0
        %594 = vmatpush1.bf16.xpose.msra.mxu0 0
        %595 = vmatprep.subr.bf16.mxu0 0
        %596 = vmatpush1.bf16.xpose.msra.mxu0 0
        %597 = vmatprep.subr.bf16.mxu0 0
        %598 = vmatpush1.bf16.xpose.msra.mxu0 0
        %599 = vmatprep.subr.bf16.mxu0 0
        %600 = vmatpush1.bf16.xpose.msra.mxu0 0
        %601 = vmatprep.subr.bf16.mxu0 0
        %602 = vmatpush1.bf16.xpose.msra.mxu0 0
        %603 = vmatprep.subr.bf16.mxu0 0
        %604 = vmatpush1.bf16.xpose.msra.mxu0 0
        %605 = vmatprep.subr.bf16.mxu0 0
        %606 = vmatpush1.bf16.xpose.msra.mxu0 0
        %607 = vmatprep.subr.bf16.mxu0 0
        %608 = vmatpush1.bf16.xpose.msra.mxu0 0
        %609 = vmatprep.subr.bf16.mxu0 0
        %610 = vmatpush1.bf16.xpose.msra.mxu0 0
        %611 = vmatprep.mubr.bf16.mxu0 0
        %612 = vmatmul.mubr.bf16.gmra.mrb[0].mxu0 %v480
        %v613 = vpop.f32.mrb[0].mxu0
        %v614 = vadd.f32 %v573, %v613
        %v615 = vpop.f32.mrb[0].mxu0
        %v616 = vpop.f32.mrb[0].mxu0
        %v617 = vadd.f32 %v573, %v616
        %v618 = vpop.f32.mrb[0].mxu0
        %619 = vdwg.mxu0
        %v620 = vmax.f32 %v614, 0.0
        %v621 = vmax.f32 %v617, 0.0
        %v622 = vadd.f32 %v566, %v620
        %v623 = vadd.f32 %v569, %v621
        %s624 = sld [smem:[#allocation2 + $0x2]]
        %v625 = vstv %s624
        %626 = vrot.lane.b32.xlu0 %v470, 32
        %v627 = vpop.permute.xlu0 %626
        %v629 = vsel %vm344, %v627, 0
        %631 = vmatprep.subr.bf16.mxu0 0
        %632 = vmatpush1.bf16.xpose.msra.mxu0 %v629
        %633 = vmatprep.subr.bf16.mxu0 0
        %634 = vmatpush1.bf16.xpose.msra.mxu0 0
        %635 = vmatprep.subr.bf16.mxu0 0
        %636 = vmatpush1.bf16.xpose.msra.mxu0 0
        %637 = vmatprep.subr.bf16.mxu0 0
        %638 = vmatpush1.bf16.xpose.msra.mxu0 0
        %639 = vmatprep.subr.bf16.mxu0 0
        %640 = vmatpush1.bf16.xpose.msra.mxu0 0
        %641 = vmatprep.subr.bf16.mxu0 0
        %642 = vmatpush1.bf16.xpose.msra.mxu0 0
        %643 = vmatprep.subr.bf16.mxu0 0
        %644 = vmatpush1.bf16.xpose.msra.mxu0 0
        %645 = vmatprep.subr.bf16.mxu0 0
        %646 = vmatpush1.bf16.xpose.msra.mxu0 0
        %647 = vmatprep.subr.bf16.mxu0 0
        %648 = vmatpush1.bf16.xpose.msra.mxu0 0
        %649 = vmatprep.subr.bf16.mxu0 0
        %650 = vmatpush1.bf16.xpose.msra.mxu0 0
        %651 = vmatprep.subr.bf16.mxu0 0
        %652 = vmatpush1.bf16.xpose.msra.mxu0 0
        %653 = vmatprep.subr.bf16.mxu0 0
        %654 = vmatpush1.bf16.xpose.msra.mxu0 0
        %655 = vmatprep.subr.bf16.mxu0 0
        %656 = vmatpush1.bf16.xpose.msra.mxu0 0
        %657 = vmatprep.subr.bf16.mxu0 0
        %658 = vmatpush1.bf16.xpose.msra.mxu0 0
        %659 = vmatprep.subr.bf16.mxu0 0
        %660 = vmatpush1.bf16.xpose.msra.mxu0 0
        %661 = vmatprep.subr.bf16.mxu0 0
        %662 = vmatpush1.bf16.xpose.msra.mxu0 0
        %663 = vmatprep.mubr.bf16.mxu0 0
        %664 = vmatmul.mubr.bf16.gmra.mrb[0].mxu0 %v480
        %v665 = vpop.f32.mrb[0].mxu0
        %v666 = vadd.f32 %v625, %v665
        %v667 = vpop.f32.mrb[0].mxu0
        %v668 = vpop.f32.mrb[0].mxu0
        %v669 = vadd.f32 %v625, %v668
        %v670 = vpop.f32.mrb[0].mxu0
        %671 = vdwg.mxu0
        %v672 = vmax.f32 %v666, 0.0
        %v673 = vmax.f32 %v669, 0.0
        %v674 = vadd.f32 %v622, %v672
        %v675 = vadd.f32 %v623, %v673
        %s676 = sld [smem:[#allocation2 + $0x3]]
        %v677 = vstv %s676
        %v679 = vsel %vm344, %v471, 0
        %681 = vmatprep.subr.bf16.mxu0 0
        %682 = vmatpush1.bf16.xpose.msra.mxu0 %v679
        %683 = vmatprep.subr.bf16.mxu0 0
        %684 = vmatpush1.bf16.xpose.msra.mxu0 0
        %685 = vmatprep.subr.bf16.mxu0 0
        %686 = vmatpush1.bf16.xpose.msra.mxu0 0
        %687 = vmatprep.subr.bf16.mxu0 0
        %688 = vmatpush1.bf16.xpose.msra.mxu0 0
        %689 = vmatprep.subr.bf16.mxu0 0
        %690 = vmatpush1.bf16.xpose.msra.mxu0 0
        %691 = vmatprep.subr.bf16.mxu0 0
        %692 = vmatpush1.bf16.xpose.msra.mxu0 0
        %693 = vmatprep.subr.bf16.mxu0 0
        %694 = vmatpush1.bf16.xpose.msra.mxu0 0
        %695 = vmatprep.subr.bf16.mxu0 0
        %696 = vmatpush1.bf16.xpose.msra.mxu0 0
        %697 = vmatprep.subr.bf16.mxu0 0
        %698 = vmatpush1.bf16.xpose.msra.mxu0 0
        %699 = vmatprep.subr.bf16.mxu0 0
        %700 = vmatpush1.bf16.xpose.msra.mxu0 0
        %701 = vmatprep.subr.bf16.mxu0 0
        %702 = vmatpush1.bf16.xpose.msra.mxu0 0
        %703 = vmatprep.subr.bf16.mxu0 0
        %704 = vmatpush1.bf16.xpose.msra.mxu0 0
        %705 = vmatprep.subr.bf16.mxu0 0
        %706 = vmatpush1.bf16.xpose.msra.mxu0 0
        %707 = vmatprep.subr.bf16.mxu0 0
        %708 = vmatpush1.bf16.xpose.msra.mxu0 0
        %709 = vmatprep.subr.bf16.mxu0 0
        %710 = vmatpush1.bf16.xpose.msra.mxu0 0
        %711 = vmatprep.subr.bf16.mxu0 0
        %712 = vmatpush1.bf16.xpose.msra.mxu0 0
        %713 = vmatprep.mubr.bf16.mxu0 0
        %714 = vmatmul.mubr.bf16.gmra.mrb[0].mxu0 %v480
        %v715 = vpop.f32.mrb[0].mxu0
        %v716 = vadd.f32 %v677, %v715
        %v717 = vpop.f32.mrb[0].mxu0
        %v718 = vpop.f32.mrb[0].mxu0
        %v719 = vadd.f32 %v677, %v718
        %v720 = vpop.f32.mrb[0].mxu0
        %721 = vdwg.mxu0
        %v722 = vmax.f32 %v716, 0.0
        %v723 = vmax.f32 %v719, 0.0
        %v724 = vadd.f32 %v674, %v722
        %v725 = vadd.f32 %v675, %v723
        %vm726 = vcmask 64512
        %v727 = vsel %vm726, %v724, -inf
        %728 = vmax.xlane.f32.xlu0 %v727
        %v729 = vpop.xlane.xlu0 %728
        %v730 = vsel %vm726, %v725, -inf
        %731 = vmax.xlane.f32.xlu0 %v730
        %v732 = vpop.xlane.xlu0 %731
        %vm733 = vcmp.eq.f32.partialorder %v724, %v729
        %vm734 = vcmp.eq.f32.partialorder %v725, %v732
        %v735 = vsel %vm733, %v473, 8
        %v736 = vsel %vm734, %v473, 8
        %v737 = vsel %vm726, %v735, 2147483647
        %v738 = vand.u32 %v737, 65535
        %v739 = vshra.s32 %v737, 16
        %v740 = vcvt.s32.f32 %v738
        %v741 = vcvt.s32.f32 %v739
        %742 = vmin.xlane.f32.xlu0 %v741
        %v743 = vpop.xlane.xlu0 %742
        %vm744 = vcmp.eq.f32.partialorder %v741, %v743
        %v745 = vsel %vm744, %v740, inf
        %746 = vmin.xlane.f32.xlu0 %v745
        %v747 = vpop.xlane.xlu0 %746
        %v748 = vcvt.f32.s32 %v747
        %v749 = vcvt.f32.s32 %v743
        %v750 = vshll.u32 %v749, 16
        %v751 = vadd.s32 %v750, %v748
        %v752 = vsel %vm726, %v736, 2147483647
        %v753 = vand.u32 %v752, 65535
        %v754 = vshra.s32 %v752, 16
        %v755 = vcvt.s32.f32 %v753
        %v756 = vcvt.s32.f32 %v754
        %757 = vmin.xlane.f32.xlu0 %v756
        %v758 = vpop.xlane.xlu0 %757
        %vm759 = vcmp.eq.f32.partialorder %v756, %v758
        %v760 = vsel %vm759, %v755, inf
        %761 = vmin.xlane.f32.xlu0 %v760
        %v762 = vpop.xlane.xlu0 %761
        %v763 = vcvt.f32.s32 %v762
        %v764 = vcvt.f32.s32 %v758
        %v765 = vshll.u32 %v764, 16
        %v766 = vadd.s32 %v765, %v763
        %vm767 = vcmp.eq.s32.totalorder %v473, %v751
        %vm768 = vcmp.eq.s32.totalorder %v473, %v766
        %v769 = vsel %vm767, %v724, 0.0
        %v770 = vsel %vm768, %v725, 0.0
        %v771 = vsel %vm767, -inf, %v724
        %v772 = vsel %vm768, -inf, %v725
        %v773 = vsel %vm726, %v771, -inf
        %774 = vmax.xlane.f32.xlu0 %v773
        %v775 = vpop.xlane.xlu0 %774
        %v776 = vsel %vm726, %v772, -inf
        %777 = vmax.xlane.f32.xlu0 %v776
        %v778 = vpop.xlane.xlu0 %777
        %vm779 = vcmp.eq.f32.partialorder %v771, %v775
        %vm780 = vcmp.eq.f32.partialorder %v772, %v778
        %v781 = vsel %vm779, %v473, 8
        %v782 = vsel %vm780, %v473, 8
        %v783 = vsel %vm726, %v781, 2147483647
        %v784 = vand.u32 %v783, 65535
        %v785 = vshra.s32 %v783, 16
        %v786 = vcvt.s32.f32 %v784
        %v787 = vcvt.s32.f32 %v785
        %788 = vmin.xlane.f32.xlu0 %v787
        %v789 = vpop.xlane.xlu0 %788
        %vm790 = vcmp.eq.f32.partialorder %v787, %v789
        %v791 = vsel %vm790, %v786, inf
        %792 = vmin.xlane.f32.xlu0 %v791
        %v793 = vpop.xlane.xlu0 %792
        %v794 = vcvt.f32.s32 %v793
        %v795 = vcvt.f32.s32 %v789
        %v796 = vshll.u32 %v795, 16
        %v797 = vadd.s32 %v796, %v794
        %v798 = vsel %vm726, %v782, 2147483647
        %v799 = vand.u32 %v798, 65535
        %v800 = vshra.s32 %v798, 16
        %v801 = vcvt.s32.f32 %v799
        %v802 = vcvt.s32.f32 %v800
        %803 = vmin.xlane.f32.xlu0 %v802
        %v804 = vpop.xlane.xlu0 %803
        %vm805 = vcmp.eq.f32.partialorder %v802, %v804
        %v806 = vsel %vm805, %v801, inf
        %807 = vmin.xlane.f32.xlu0 %v806
        %v808 = vpop.xlane.xlu0 %807
        %v809 = vcvt.f32.s32 %v808
        %v810 = vcvt.f32.s32 %v804
        %v811 = vshll.u32 %v810, 16
        %v812 = vadd.s32 %v811, %v809
        %vm813 = vcmp.eq.s32.totalorder %v473, %v797
        %vm814 = vcmp.eq.s32.totalorder %v473, %v812
        %v815 = vsel %vm813, %v724, %v769
        %v816 = vsel %vm814, %v725, %v770
        %v817 = vsel %vm813, -inf, %v771
        %v818 = vsel %vm814, -inf, %v772
        %v819 = vsel %vm726, %v817, -inf
        %820 = vmax.xlane.f32.xlu0 %v819
        %v821 = vpop.xlane.xlu0 %820
        %v822 = vsel %vm726, %v818, -inf
        %823 = vmax.xlane.f32.xlu0 %v822
        %v824 = vpop.xlane.xlu0 %823
        %vm825 = vcmp.eq.f32.partialorder %v817, %v821
        %vm826 = vcmp.eq.f32.partialorder %v818, %v824
        %v827 = vsel %vm825, %v473, 8
        %v828 = vsel %vm826, %v473, 8
        %v829 = vsel %vm726, %v827, 2147483647
        %v830 = vand.u32 %v829, 65535
        %v831 = vshra.s32 %v829, 16
        %v832 = vcvt.s32.f32 %v830
        %v833 = vcvt.s32.f32 %v831
        %834 = vmin.xlane.f32.xlu0 %v833
        %v835 = vpop.xlane.xlu0 %834
        %vm836 = vcmp.eq.f32.partialorder %v833, %v835
        %v837 = vsel %vm836, %v832, inf
        %838 = vmin.xlane.f32.xlu0 %v837
        %v839 = vpop.xlane.xlu0 %838
        %v840 = vcvt.f32.s32 %v839
        %v841 = vcvt.f32.s32 %v835
        %v842 = vshll.u32 %v841, 16
        %v843 = vadd.s32 %v842, %v840
        %v844 = vsel %vm726, %v828, 2147483647
        %v845 = vand.u32 %v844, 65535
        %v846 = vshra.s32 %v844, 16
        %v847 = vcvt.s32.f32 %v845
        %v848 = vcvt.s32.f32 %v846
        %849 = vmin.xlane.f32.xlu0 %v848
        %v850 = vpop.xlane.xlu0 %849
        %vm851 = vcmp.eq.f32.partialorder %v848, %v850
        %v852 = vsel %vm851, %v847, inf
        %853 = vmin.xlane.f32.xlu0 %v852
        %v854 = vpop.xlane.xlu0 %853
        %v855 = vcvt.f32.s32 %v854
        %v856 = vcvt.f32.s32 %v850
        %v857 = vshll.u32 %v856, 16
        %v858 = vadd.s32 %v857, %v855
        %vm859 = vcmp.eq.s32.totalorder %v473, %v843
        %vm860 = vcmp.eq.s32.totalorder %v473, %v858
        %v861 = vsel %vm859, %v724, %v815
        %v862 = vsel %vm860, %v725, %v816
        %v863 = vsel %vm859, -inf, %v817
        %v864 = vsel %vm860, -inf, %v818
        %v865 = vsel %vm726, %v863, -inf
        %866 = vmax.xlane.f32.xlu0 %v865
        %v867 = vpop.xlane.xlu0 %866
        %v868 = vsel %vm726, %v864, -inf
        %869 = vmax.xlane.f32.xlu0 %v868
        %v870 = vpop.xlane.xlu0 %869
        %vm871 = vcmp.eq.f32.partialorder %v863, %v867
        %vm872 = vcmp.eq.f32.partialorder %v864, %v870
        %v873 = vsel %vm871, %v473, 8
        %v874 = vsel %vm872, %v473, 8
        %v875 = vsel %vm726, %v873, 2147483647
        %v876 = vand.u32 %v875, 65535
        %v877 = vshra.s32 %v875, 16
        %v878 = vcvt.s32.f32 %v876
        %v879 = vcvt.s32.f32 %v877
        %880 = vmin.xlane.f32.xlu0 %v879
        %v881 = vpop.xlane.xlu0 %880
        %vm882 = vcmp.eq.f32.partialorder %v879, %v881
        %v883 = vsel %vm882, %v878, inf
        %884 = vmin.xlane.f32.xlu0 %v883
        %v885 = vpop.xlane.xlu0 %884
        %v886 = vcvt.f32.s32 %v885
        %v887 = vcvt.f32.s32 %v881
        %v888 = vshll.u32 %v887, 16
        %v889 = vadd.s32 %v888, %v886
        %v890 = vsel %vm726, %v874, 2147483647
        %v891 = vand.u32 %v890, 65535
        %v892 = vshra.s32 %v890, 16
        %v893 = vcvt.s32.f32 %v891
        %v894 = vcvt.s32.f32 %v892
        %895 = vmin.xlane.f32.xlu0 %v894
        %v896 = vpop.xlane.xlu0 %895
        %vm897 = vcmp.eq.f32.partialorder %v894, %v896
        %v898 = vsel %vm897, %v893, inf
        %899 = vmin.xlane.f32.xlu0 %v898
        %v900 = vpop.xlane.xlu0 %899
        %v901 = vcvt.f32.s32 %v900
        %v902 = vcvt.f32.s32 %v896
        %v903 = vshll.u32 %v902, 16
        %v904 = vadd.s32 %v903, %v901
        %vm905 = vcmp.eq.s32.totalorder %v473, %v889
        %vm906 = vcmp.eq.s32.totalorder %v473, %v904
        %v907 = vsel %vm905, %v724, %v861
        %v908 = vsel %vm906, %v725, %v862
        %909 = vst.msk [vmem:[%s312] sm:$0xff] %vm726, %v907
        %910 = vst.msk [vmem:[%s312 + $0x8] sm:$0xff] %vm726, %v908
        %p911 = scmp.lt.s32.totalorder %s22, 1
        %s912 = scalar_select %p911, %s22, 1
        %s913 = smul.addr %s912, 2
        %s914 = smul.addr %s913, 8
        %s915 = scalar_lea.vmem %s6, %s914
        // Predicated region
        $region61: #{tpu_custom_call.1} parent=43 // pred_check
          %p916 = pneg %p171
        $region62: #{tpu_custom_call.1} parent=43 // pred_check_branch
          %918 = sbr.rel (%p916) target = $region64
        $region63: #{tpu_custom_call.1} parent=43 // pred_region
          _
        $region64: #{tpu_custom_call.1} parent=43 // pred_fallthru
          _
      $region44: #{tpu_custom_call.1} parent=5 // pred_fallthru
        _
      %p919 = scmp.le.s32.totalorder 2, %s17
      // Predicated region
      $region65: #{tpu_custom_call.1} parent=5 // pred_check
        %p920 = pneg %p919
      $region66: #{tpu_custom_call.1} parent=5 // pred_check_branch
        %922 = sbr.rel (%p920) target = $region68
      $region67: #{tpu_custom_call.1} parent=5 // pred_region
        %s923 = ssub.s32 %s17, 2
        // Predicated region
        $region69: #{tpu_custom_call.1} parent=67 // pred_check
          %p924 = pneg %p177
        $region70: #{tpu_custom_call.1} parent=67 // pred_check_branch
          %926 = sbr.rel (%p924) target = $region72
        $region71: #{tpu_custom_call.1} parent=67 // pred_region
          %p927 = scmp.lt.s32.totalorder %s23, 1
          %s928 = scalar_select %p927, %s23, 1
          %s929 = smul.addr %s928, 2
          %s930 = smul.addr %s929, 8
          %s931 = scalar_lea.vmem %s6, %s930
        $region72: #{tpu_custom_call.1} parent=67 // pred_fallthru
          _
      $region68: #{tpu_custom_call.1} parent=5 // pred_fallthru
        _
    $region6: #{tpu_custom_call.1} parent=1 // loop_footer
      %s21 = sadd.s32 1, %s17
    $region7: #{tpu_custom_call.1} parent=1 // loop_footer_branch
      %16 = sbr.rel target = $region3
    $region8: #{tpu_custom_call.1} parent=1 // loop_exit
      _
    %932 = vsyncpa [#allocation3], 1
    %s933 = scalar_lea.sflag [#allocation3], 1
    %934 = vsyncpa %s933, 1
    %935 = vsyncpa [#allocation7], 1
    %936 = vsyncpa [#allocation4], 1
    %s937 = scalar_lea.sflag [#allocation4], 1
    %938 = vsyncpa %s937, 1

</llo_original>
